<compile_context>
chip_gen: v7x
topology: tpu7x:2x2x1
jax: 0.10.0
libtpu: 0.0.40
codegen_flags: <defaults>
</compile_context>

<pallas_src>
import functools

import jax
import jax.numpy as jnp
from jax.experimental import pallas as pl
from jax.experimental.pallas import tpu as pltpu

# 48 MiB scoped VMEM: above the 16/32 MiB defaults, below v7x's 64 MiB physical.
_VMEM_LIMIT_BYTES = 48 * 1024 * 1024


def _cparams():
    return pltpu.CompilerParams(
        dimension_semantics=("parallel",),
        vmem_limit_bytes=_VMEM_LIMIT_BYTES,
    )


def _const2d(shape):
    """BlockSpec for a grid-invariant 2-D operand: fetched once, single-buffered."""
    return pl.BlockSpec(shape, lambda i: (0, 0), pipeline_mode=pl.Buffered(1))


def _row_tile(rows, width):
    """Fixed large row tile (256-multiple); Pallas masks the partial tail block."""
    cap = 256 if width >= 512 else 512
    return rows if rows <= cap else cap


# ----------------------------------------------------------------------------
# in-kernel math helpers
# ----------------------------------------------------------------------------
def _erf_f32(x):
    # Abramowitz & Stegun 7.1.26 polynomial, |err| < ~1.5e-7 in f32.
    a1, a2, a3, a4, a5 = (0.254829592, -0.284496736, 1.421413741,
                          -1.453152027, 1.061405429)
    p = 0.3275911
    s = jnp.where(x < 0.0, -1.0, 1.0)
    ax = jnp.abs(x)
    # reciprocal + exp both go to the EUP slot -> nearly free under the MXU.
    t = pl.reciprocal(1.0 + p * ax, approx=True)
    poly = ((((a5 * t + a4) * t + a3) * t + a2) * t + a1) * t
    return s * (1.0 - poly * jnp.exp(-ax * ax))


def _gelu_exact(x):
    # Matches torch.nn.GELU() (erf form) up to the polynomial / approx-recip error.
    return 0.5 * x * (1.0 + _erf_f32(x * 0.7071067811865476))


def _channel_norm_f32(x, eps):
    # Per-row (= per-pixel) normalization over the lane (channel) axis.
    # Two-pass variance E[(x-m)^2], identical to the PyTorch ChannelNorm.
    m = jnp.mean(x, axis=-1, keepdims=True)
    d = x - m
    var = jnp.mean(d * d, axis=-1, keepdims=True)
    return d * jax.lax.rsqrt(var + eps)


# ----------------------------------------------------------------------------
# Pallas kernels
# ----------------------------------------------------------------------------
def _mm_kernel(x_ref, w_ref, b_ref, o_ref):
    # (TR, Cin) @ (Cin, Cout) + bias; bf16 operands, f32 accumulate.
    x = x_ref[...].astype(jnp.bfloat16)
    y = jnp.dot(x, w_ref[...], preferred_element_type=jnp.float32)
    o_ref[...] = (y + b_ref[...]).astype(o_ref.dtype)


def _mm_norm_kernel(x_ref, w_ref, b_ref, g_ref, bt_ref, o_ref, *, eps):
    # fused downsample: (TR, Cin) @ (Cin, Cout) + bias, then ChannelNorm affine.
    x = x_ref[...].astype(jnp.bfloat16)
    y = jnp.dot(x, w_ref[...], preferred_element_type=jnp.float32) + b_ref[...]
    y = _channel_norm_f32(y, eps)
    o_ref[...] = (g_ref[...] * y + bt_ref[...]).astype(o_ref.dtype)


def _block_mlp_kernel(x_ref, res_ref, g_ref, bt_ref, w2_ref, b2_ref,
                      w3_ref, b3_ref, o_ref, *, eps):
    # fused ConvNeXt block tail: ChannelNorm -> 1x1 expand + GELU ->
    # 1x1 project -> + residual, all on one (TR, C) row tile.
    x = x_ref[...].astype(jnp.float32)
    y = _channel_norm_f32(x, eps)
    y = g_ref[...] * y + bt_ref[...]
    h = jnp.dot(y.astype(jnp.bfloat16), w2_ref[...],
                preferred_element_type=jnp.float32) + b2_ref[...]
    h = _gelu_exact(h)
    out = jnp.dot(h.astype(jnp.bfloat16), w3_ref[...],
                  preferred_element_type=jnp.float32) + b3_ref[...]
    out = out + res_ref[...].astype(jnp.float32)
    o_ref[...] = out.astype(o_ref.dtype)


def _dwconv_kernel(x_ref, w_ref, b_ref, o_ref, *, K, H, W):
    # depthwise KxK conv with replicate padding built in-kernel (VMEM only).
    # x_ref: (1, H, W, C), w_ref: (K*K, C), b_ref: (1, C), o_ref: (1, H, W, C)
    # TODO(synk): restructure the kw loop around pltpu.roll (XLU) + edge masks
    # and grid over (N, H-bands) with a 3-row halo; the concat/slice form is
    # kept because in-kernel sublane rolls/reshapes are shape-sensitive.
    # TODO(synk): fuse this conv with the block tail (norm+MLP+residual) to
    # drop one HBM round trip of the activation per block.
    p = K // 2
    x = x_ref[0].astype(jnp.float32)            # (H, W, C)
    C = x.shape[-1]
    w = w_ref[...].astype(jnp.float32)          # (K*K, C)

    # replicate ("edge") padding: H along the major axis, W along sublanes.
    top = jnp.broadcast_to(x[0:1], (p, W, C))
    bot = jnp.broadcast_to(x[H - 1:H], (p, W, C))
    xh = jnp.concatenate([top, x, bot], axis=0)                   # (H+2p, W, C)
    left = jnp.broadcast_to(xh[:, 0:1, :], (H + 2 * p, p, C))
    right = jnp.broadcast_to(xh[:, W - 1:W, :], (H + 2 * p, p, C))
    xp = jnp.concatenate([left, xh, right], axis=1)               # (H+2p, W+2p, C)

    acc = jnp.zeros((H, W, C), jnp.float32)
    for kh in range(K):
        strip = xp[kh:kh + H]                   # major-axis offset (cheap)
        for kw in range(K):
            acc = acc + strip[:, kw:kw + W, :] * w[kh * K + kw]
    o_ref[0] = (acc + b_ref[...]).astype(o_ref.dtype)


def _pool_linear_kernel(x_ref, w_ref, b_ref, o_ref):
    # global spatial mean fused with the output Linear, per batch tile.
    # x_ref: (TN, H*W, C) -> mean over axis 1 -> (TN, C) @ (C, F) + b
    x = x_ref[...].astype(jnp.float32)
    pooled = jnp.mean(x, axis=1)
    y = jnp.dot(pooled.astype(jnp.bfloat16), w_ref[...],
                preferred_element_type=jnp.float32)
    o_ref[...] = (y + b_ref[...]).astype(o_ref.dtype)


# ----------------------------------------------------------------------------
# pallas_call wrappers (row-tiled, parallel grid, explicit VMEM budget)
# ----------------------------------------------------------------------------
def matmul_bias(x, w, b):
    rows, cin = x.shape
    cout = w.shape[1]
    tr = _row_tile(rows, cout)
    return pl.pallas_call(
        _mm_kernel,
        out_shape=jax.ShapeDtypeStruct((rows, cout), jnp.float32),
        grid=(pl.cdiv(rows, tr),),
        in_specs=[pl.BlockSpec((tr, cin), lambda i: (i, 0)),
                  _const2d((cin, cout)),
                  _const2d((1, cout))],
        out_specs=pl.BlockSpec((tr, cout), lambda i: (i, 0)),
        compiler_params=_cparams(),
    )(x, w, b.reshape(1, cout))


def matmul_bias_norm(x, w, b, gamma, beta, eps=1e-6):
    rows, cin = x.shape
    cout = w.shape[1]
    tr = _row_tile(rows, cout)
    return pl.pallas_call(
        functools.partial(_mm_norm_kernel, eps=eps),
        out_shape=jax.ShapeDtypeStruct((rows, cout), jnp.float32),
        grid=(pl.cdiv(rows, tr),),
        in_specs=[pl.BlockSpec((tr, cin), lambda i: (i, 0)),
                  _const2d((cin, cout)),
                  _const2d((1, cout)),
                  _const2d((1, cout)),
                  _const2d((1, cout))],
        out_specs=pl.BlockSpec((tr, cout), lambda i: (i, 0)),
        compiler_params=_cparams(),
    )(x, w, b.reshape(1, cout), gamma.reshape(1, cout), beta.reshape(1, cout))


def block_mlp(x_rows, res_rows, gamma, beta, w2, b2, w3, b3, eps=1e-6):
    rows, c = x_rows.shape
    ffn = w2.shape[1]
    tr = _row_tile(rows, c)          # stage-aware: 256 rows once C >= 512
    row_in = pl.BlockSpec((tr, c), lambda i: (i, 0))
    return pl.pallas_call(
        functools.partial(_block_mlp_kernel, eps=eps),
        out_shape=jax.ShapeDtypeStruct((rows, c), jnp.float32),
        grid=(pl.cdiv(rows, tr),),
        in_specs=[row_in, row_in,
                  _const2d((1, c)),
                  _const2d((1, c)),
                  _const2d((c, ffn)),
                  _const2d((1, ffn)),
                  _const2d((ffn, c)),
                  _const2d((1, c))],
        out_specs=pl.BlockSpec((tr, c), lambda i: (i, 0)),
        compiler_params=_cparams(),
    )(x_rows, res_rows, gamma.reshape(1, c), beta.reshape(1, c),
      w2, b2.reshape(1, ffn), w3, b3.reshape(1, c))


def depthwise_conv7(x, w, b):
    # x: (N, H, W, C);  w: (49, C) f32;  b: (C,) f32
    N, H, W, C = x.shape
    K = 7
    return pl.pallas_call(
        functools.partial(_dwconv_kernel, K=K, H=H, W=W),
        out_shape=jax.ShapeDtypeStruct((N, H, W, C), x.dtype),
        grid=(N,),
        in_specs=[pl.BlockSpec((1, H, W, C), lambda n: (n, 0, 0, 0)),
                  _const2d((K * K, C)),
                  _const2d((1, C))],
        out_specs=pl.BlockSpec((1, H, W, C), lambda n: (n, 0, 0, 0)),
        compiler_params=_cparams(),
    )(x, w, b.reshape(1, C))


def pool_linear(x, w, b):
    # x: (N, H, W, C) -> mean over (H, W) -> Linear -> (N, F). Tiled over batch.
    N, H, W, C = x.shape
    F = w.shape[1]
    hw = H * W
    tn = N if N <= 64 else 64
    return pl.pallas_call(
        _pool_linear_kernel,
        out_shape=jax.ShapeDtypeStruct((N, F), jnp.float32),
        grid=(pl.cdiv(N, tn),),
        in_specs=[pl.BlockSpec((tn, hw, C), lambda i: (i, 0, 0)),
                  _const2d((C, F)),
                  _const2d((1, F))],
        out_specs=pl.BlockSpec((tn, F), lambda i: (i, 0)),
        compiler_params=_cparams(),
    )(x.reshape(N, hw, C), w, b.reshape(1, F))


# ----------------------------------------------------------------------------
# glue: patch extraction, parameters, forward pass
# ----------------------------------------------------------------------------
def extract_patches(x, k):
    # stem only: (N, H, W, C) -> (N*(H/k)*(W/k), k*k*C), patch order (kh, kw, c)
    N, H, W, C = x.shape
    x = x.reshape(N, H // k, k, W // k, k, C)
    x = x.transpose(0, 1, 3, 2, 4, 5)
    return x.reshape(N * (H // k) * (W // k), k * k * C)


def downsample_patches(x):
    # 2x2 stride-2 patches: four strided slices concatenated on the lane axis;
    # feature order (kh, kw, c).
    # TODO(synk): fold this gather into the downsample kernel (strided pl.ds /
    # even-odd row reads in VMEM) so the patch tensor never hits HBM.
    x00 = x[:, 0::2, 0::2, :]
    x01 = x[:, 0::2, 1::2, :]
    x10 = x[:, 1::2, 0::2, :]
    x11 = x[:, 1::2, 1::2, :]
    p = jnp.concatenate([x00, x01, x10, x11], axis=-1)
    N, Ho, Wo, C4 = p.shape
    return p.reshape(N * Ho * Wo, C4)


def init_params(key, input_channels, stages, channels, output_features):
    keys = iter(jax.random.split(key, 512))

    def nrm(shape, scale=0.05, dtype=jnp.float32):
        return (scale * jax.random.normal(next(keys), shape)).astype(dtype)

    bf16 = jnp.bfloat16  # MXU-facing weights live in bf16; biases/affine in f32
    params = {
        "stem": {"w": nrm((4 * 4 * input_channels, channels[0]), dtype=bf16),
                 "b": nrm((channels[0],))},
        "seq": [],
        "out": {"w": nrm((channels[-1], output_features), dtype=bf16),
                "b": nrm((output_features,))},
    }
    for i, (n_blocks, c) in enumerate(zip(stages, channels)):
        for _ in range(n_blocks):
            ffn = c * 4
            params["seq"].append({
                "type": "block",
                "dw_w": nrm((7 * 7, c)), "dw_b": nrm((c,)),   # VPU path stays f32
                "norm_g": jnp.ones((c,), jnp.float32),
                "norm_b": jnp.zeros((c,), jnp.float32),
                "w2": nrm((c, ffn), dtype=bf16), "b2": nrm((ffn,)),
                "w3": nrm((ffn, c), dtype=bf16), "b3": nrm((c,)),
            })
        if i != len(stages) - 1:
            # downsample conv fused with its following ChannelNorm
            params["seq"].append({
                "type": "down",
                "w": nrm((2 * 2 * channels[i], channels[i + 1]), dtype=bf16),
                "b": nrm((channels[i + 1],)),
                "norm_g": jnp.ones((channels[i + 1],), jnp.float32),
                "norm_b": jnp.zeros((channels[i + 1],), jnp.float32),
            })
    return params


def convnext_block(x, p):
    N, H, W, C = x.shape
    rows = N * H * W
    h = depthwise_conv7(x, p["dw_w"], p["dw_b"])                   # c1 (7x7 dw)
    out = block_mlp(h.reshape(rows, C), x.reshape(rows, C),        # norm+c2+gelu+c3+res
                    p["norm_g"], p["norm_b"],
                    p["w2"], p["b2"], p["w3"], p["b3"])
    return out.reshape(N, H, W, C)


def convnext_forward(params, x_nchw):
    x = jnp.transpose(x_nchw, (0, 2, 3, 1))        # NCHW -> NHWC (C on lanes)
    N, H, W, _ = x.shape

    # stem: Conv2d(k=4, stride=4) == patchify + row-tiled matmul
    c0 = params["stem"]["w"].shape[1]
    x = matmul_bias(extract_patches(x, 4), params["stem"]["w"], params["stem"]["b"])
    x = x.reshape(N, H // 4, W // 4, c0)

    for layer in params["seq"]:
        if layer["type"] == "block":
            x = convnext_block(x, layer)
        else:  # fused downsample conv (2x2/s2) + ChannelNorm (conv first, then norm)
            n, h, w, _ = x.shape
            cout = layer["w"].shape[1]
            y = matmul_bias_norm(downsample_patches(x), layer["w"], layer["b"],
                                 layer["norm_g"], layer["norm_b"])
            x = y.reshape(n, h // 2, w // 2, cout)

    # global mean over (H, W) fused with the output Linear.
    # TODO(synk): minibatch_std=True branch (batch-std feature + two Linears)
    # is not implemented; this is the default minibatch_std=False path.
    return pool_linear(x, params["out"]["w"], params["out"]["b"])


if __name__ == "__main__":
    key = jax.random.PRNGKey(0)
    kp, kx = jax.random.split(key)

    # Small but non-trivial config: 2 stages, 1 block each, spatial 32x32 so
    # 32 -> 8 (stem) -> 4 (downsample).
    input_channels = 3
    stages = [1, 1]
    channels = [32, 64]
    output_features = 64

    params = init_params(kp, input_channels, stages, channels, output_features)
    x = jax.random.normal(kx, (2, input_channels, 32, 32), dtype=jnp.float32)

    out = convnext_forward(params, x)
    out = jax.block_until_ready(out)
    assert out.shape == (2, output_features)
    assert bool(jnp.all(jnp.isfinite(out)))
    print("KERNEL_OK")
</pallas_src>

<mosaic_0001>
module attributes {stable_mosaic.version = 11 : i64} {
  func.func @_mm_kernel(%arg0: i32, %arg1: memref<128x48xf32, #tpu.memory_space<vmem>>, %arg2: memref<48x32xbf16, #tpu.memory_space<vmem>>, %arg3: memref<1x32xf32, #tpu.memory_space<vmem>>, %arg4: memref<128x32xf32, #tpu.memory_space<vmem>>) attributes {dimension_semantics = [#tpu.dimension_semantics<parallel>], iteration_bounds = array<i64: 1>, scalar_prefetch = 0 : i64, scratch_operands = 0 : i64, tpu.core_type = #tpu.core_type<tc>, window_params = [{transform_indices = @transform_0, window_bounds = array<i64: 128, 48>}, {pipeline_mode = #tpu.pipeline_mode<synchronous>, transform_indices = @transform_1, window_bounds = array<i64: 48, 32>}, {pipeline_mode = #tpu.pipeline_mode<synchronous>, transform_indices = @transform_2, window_bounds = array<i64: 1, 32>}, {transform_indices = @transform_3, window_bounds = array<i64: 128, 32>}]} {
    %c0 = arith.constant 0 : index
    %c0_0 = arith.constant 0 : index
    %0 = vector.load %arg1[%c0, %c0_0] : memref<128x48xf32, #tpu.memory_space<vmem>>, vector<128x48xf32>
    %1 = arith.truncf %0 : vector<128x48xf32> to vector<128x48xbf16>
    %c0_1 = arith.constant 0 : index
    %c0_2 = arith.constant 0 : index
    %2 = vector.load %arg2[%c0_1, %c0_2] : memref<48x32xbf16, #tpu.memory_space<vmem>>, vector<48x32xbf16>
    %cst = arith.constant dense<0.000000e+00> : vector<128x32xf32>
    %3 = tpu.matmul %1, %2, %cst {dimension_numbers = #tpu.dot_dimension_numbers<[1], [0], [0], [1], [0, 0, 1, 1], [], []>} : vector<128x48xbf16>, vector<48x32xbf16>, vector<128x32xf32> -> vector<128x32xf32>
    %c0_3 = arith.constant 0 : index
    %c0_4 = arith.constant 0 : index
    %4 = vector.load %arg3[%c0_3, %c0_4] : memref<1x32xf32, #tpu.memory_space<vmem>>, vector<1x32xf32>
    %5 = vector.broadcast %4 : vector<1x32xf32> to vector<128x32xf32>
    %6 = arith.addf %3, %5 : vector<128x32xf32>
    %c0_5 = arith.constant 0 : index
    %c0_6 = arith.constant 0 : index
    %7 = vector.load %arg4[%c0_5, %c0_6] : memref<128x32xf32, #tpu.memory_space<vmem>>, vector<128x32xf32>
    tpu.vector_store %arg4[%c0_5, %c0_6], %6 {strides = array<i32>} : memref<128x32xf32, #tpu.memory_space<vmem>>, vector<128x32xf32>,
    return
  }
  func.func @transform_0(%arg0: i32) -> (i32, i32) {
    %c0_i32 = arith.constant 0 : i32
    %c0_i32_0 = arith.constant 0 : i32
    return %arg0, %c0_i32 : i32, i32
  }
  func.func @transform_1(%arg0: i32) -> (i32, i32) {
    %c0_i32 = arith.constant 0 : i32
    %c0_i32_0 = arith.constant 0 : i32
    %c0_i32_1 = arith.constant 0 : i32
    return %c0_i32, %c0_i32_0 : i32, i32
  }
  func.func @transform_2(%arg0: i32) -> (i32, i32) {
    %c0_i32 = arith.constant 0 : i32
    %c0_i32_0 = arith.constant 0 : i32
    %c0_i32_1 = arith.constant 0 : i32
    return %c0_i32, %c0_i32_0 : i32, i32
  }
  func.func @transform_3(%arg0: i32) -> (i32, i32) {
    %c0_i32 = arith.constant 0 : i32
    %c0_i32_0 = arith.constant 0 : i32
    return %arg0, %c0_i32 : i32, i32
  }
}

</mosaic_0001>

<llo_original>
// kernel: tpu_custom_call.1
$region0: #{tpu_custom_call.1}
  #allocation0 [shape = 'u32[]', space=smem, size = 0x4, offset = 0x4, fixed_abs, tag = 'smem constant byte address 0x4 - core index']
  #allocation1 [shape = 'u32[144,128]{1,0:T(1,128)}', space=vmem, size = 0x12000, scoped, tag = 'internal scratch']
  %s0 = inlined_call_operand.vmem [shape: f32[128,48], index: 0, kind: input, shape index: {}]
  %s1 = inlined_call_operand.vmem [shape: bf16[48,32], index: 1, kind: input, shape index: {}]
  %s2 = inlined_call_operand.vmem [shape: f32[1,32], index: 2, kind: input, shape index: {}]
  %s3 = inlined_call_operand.vmem [shape: f32[128,32], index: 3, kind: output, shape index: {}]
  %s4 = sld [smem:[#allocation0]]
  $region22: #{tpu_custom_call.1} parent=0
    _
  %s6 = ssub.s32 1, %s4
  %s7 = scalar_select 0, %s6, %s4
  // Predicated region
  $region2: #{tpu_custom_call.1} parent=0 // pred_check
    _
  $region3: #{tpu_custom_call.1} parent=0 // pred_check_branch
    %9 = sbr.rel (0) target = $region5
  $region4: #{tpu_custom_call.1} parent=0 // pred_region
    _
  $region5: #{tpu_custom_call.1} parent=0 // pred_fallthru
    _
  // Predicated region
  $region6: #{tpu_custom_call.1} parent=0 // pred_check
    _
  $region7: #{tpu_custom_call.1} parent=0 // pred_check_branch
    %11 = sbr.rel (0) target = $region9
  $region8: #{tpu_custom_call.1} parent=0 // pred_region
    _
  $region9: #{tpu_custom_call.1} parent=0 // pred_fallthru
    _
  // Predicated region
  $region10: #{tpu_custom_call.1} parent=0 // pred_check
    _
  $region11: #{tpu_custom_call.1} parent=0 // pred_check_branch
    %13 = sbr.rel (0) target = $region13
  $region12: #{tpu_custom_call.1} parent=0 // pred_region
    _
  $region13: #{tpu_custom_call.1} parent=0 // pred_fallthru
    _
  %v15 = vld [vmem:[%s0] sm:$0xff]
  %v16 = vld [vmem:[%s0 + $0x8] sm:$0xff]
  %v17 = vld [vmem:[%s0 + $0x10] sm:$0xff]
  %v18 = vld [vmem:[%s0 + $0x18] sm:$0xff]
  %v19 = vld [vmem:[%s0 + $0x20] sm:$0xff]
  %v20 = vld [vmem:[%s0 + $0x28] sm:$0xff]
  %v21 = vld [vmem:[%s0 + $0x30] sm:$0xff]
  %v22 = vld [vmem:[%s0 + $0x38] sm:$0xff]
  %v23 = vld [vmem:[%s0 + $0x40] sm:$0xff]
  %v24 = vld [vmem:[%s0 + $0x48] sm:$0xff]
  %v25 = vld [vmem:[%s0 + $0x50] sm:$0xff]
  %v26 = vld [vmem:[%s0 + $0x58] sm:$0xff]
  %v27 = vld [vmem:[%s0 + $0x60] sm:$0xff]
  %v28 = vld [vmem:[%s0 + $0x68] sm:$0xff]
  %v29 = vld [vmem:[%s0 + $0x70] sm:$0xff]
  %v30 = vld [vmem:[%s0 + $0x78] sm:$0xff]
  %v31 = vpack.c.bf16 %v16, %v15
  %v32 = vpack.c.bf16 %v18, %v17
  %v33 = vpack.c.bf16 %v20, %v19
  %v34 = vpack.c.bf16 %v22, %v21
  %v35 = vpack.c.bf16 %v24, %v23
  %v36 = vpack.c.bf16 %v26, %v25
  %v37 = vpack.c.bf16 %v28, %v27
  %v38 = vpack.c.bf16 %v30, %v29
  %v39 = vld [vmem:[%s1] sm:$0xf]
  %v40 = vld [vmem:[%s1 + $0x4] sm:$0xf]
  %v41 = vld [vmem:[%s1 + $0x8] sm:$0xf]
  %v42 = vld [vmem:[%s1 + $0xc] sm:$0xf]
  %v43 = vld [vmem:[%s1 + $0x10] sm:$0xf]
  %v44 = vld [vmem:[%s1 + $0x14] sm:$0xf]
  %v45 = vld [vmem:[%s2] sm:$0x1]
  %v47 = vlaneseq
  %v48 = vshrl.u32 %v47, 7
  %v49 = vsub.s32 0, %v48
  %v50 = vrot.slane %v45, %v49
  %v58 = vunpack.c.l.b16 %v39
  %v59 = vunpack.c.l.b16 %v40
  %v60 = vunpack.c.l.b16 %v41
  %v61 = vunpack.c.l.b16 %v42
  %v62 = vunpack.c.l.b16 %v43
  %v63 = vunpack.c.l.b16 %v44
  %v64 = vpack.c.b16 %v59, %v58
  %v65 = vpack.c.b16 %v61, %v60
  %v66 = vpack.c.b16 %v63, %v62
  %vm70 = vcmask 392192
  %v72 = vsel %vm70, %v31, 0
  %v75 = vsel %vm70, %v32, 0
  %v78 = vsel %vm70, %v33, 0
  %v81 = vsel %vm70, %v34, 0
  %v84 = vsel %vm70, %v35, 0
  %v87 = vsel %vm70, %v36, 0
  %v90 = vsel %vm70, %v37, 0
  %v93 = vsel %vm70, %v38, 0
  %95 = vmatprep.subr.bf16.mxu0 0
  %96 = vmatpush1.bf16.msra.mxu0 %v64
  %97 = vmatprep.subr.bf16.mxu0 0
  %98 = vmatpush1.bf16.msra.mxu0 %v65
  %99 = vmatprep.subr.bf16.mxu0 0
  %100 = vmatpush1.bf16.msra.mxu0 %v66
  %101 = vmatprep.subr.bf16.mxu0 0
  %102 = vmatpush1.bf16.msra.mxu0 0
  %103 = vmatprep.subr.bf16.mxu0 0
  %104 = vmatpush1.bf16.msra.mxu0 0
  %105 = vmatprep.subr.bf16.mxu0 0
  %106 = vmatpush1.bf16.msra.mxu0 0
  %107 = vmatprep.subr.bf16.mxu0 0
  %108 = vmatpush1.bf16.msra.mxu0 0
  %109 = vmatprep.subr.bf16.mxu0 0
  %110 = vmatpush1.bf16.msra.mxu0 0
  %111 = vmatprep.subr.bf16.mxu0 0
  %112 = vmatpush1.bf16.msra.mxu0 0
  %113 = vmatprep.subr.bf16.mxu0 0
  %114 = vmatpush1.bf16.msra.mxu0 0
  %115 = vmatprep.subr.bf16.mxu0 0
  %116 = vmatpush1.bf16.msra.mxu0 0
  %117 = vmatprep.subr.bf16.mxu0 0
  %118 = vmatpush1.bf16.msra.mxu0 0
  %119 = vmatprep.subr.bf16.mxu0 0
  %120 = vmatpush1.bf16.msra.mxu0 0
  %121 = vmatprep.subr.bf16.mxu0 0
  %122 = vmatpush1.bf16.msra.mxu0 0
  %123 = vmatprep.subr.bf16.mxu0 0
  %124 = vmatpush1.bf16.msra.mxu0 0
  %125 = vmatprep.subr.bf16.mxu0 0
  %126 = vmatpush1.bf16.msra.mxu0 0
  %127 = vmatprep.mubr.bf16.mxu0 0
  %128 = vmatmul.mubr.bf16.gmra.mrb[0].mxu0 %v72
  %v129 = vpop.f32.mrb[0].mxu0
  %v130 = vadd.f32 %v50, %v129
  %v131 = vpop.f32.mrb[0].mxu0
  %v132 = vpop.f32.mrb[0].mxu0
  %v133 = vadd.f32 %v50, %v132
  %v134 = vpop.f32.mrb[0].mxu0
  %135 = vmatprep.mubr.bf16.mxu0 0
  %136 = vmatmul.mubr.bf16.gmra.mrb[0].mxu0 %v75
  %v137 = vpop.f32.mrb[0].mxu0
  %v138 = vadd.f32 %v50, %v137
  %v139 = vpop.f32.mrb[0].mxu0
  %v140 = vpop.f32.mrb[0].mxu0
  %v141 = vadd.f32 %v50, %v140
  %v142 = vpop.f32.mrb[0].mxu0
  %143 = vmatprep.mubr.bf16.mxu0 0
  %144 = vmatmul.mubr.bf16.gmra.mrb[0].mxu0 %v78
  %v145 = vpop.f32.mrb[0].mxu0
  %v146 = vadd.f32 %v50, %v145
  %v147 = vpop.f32.mrb[0].mxu0
  %v148 = vpop.f32.mrb[0].mxu0
  %v149 = vadd.f32 %v50, %v148
  %v150 = vpop.f32.mrb[0].mxu0
  %151 = vmatprep.mubr.bf16.mxu0 0
  %152 = vmatmul.mubr.bf16.gmra.mrb[0].mxu0 %v81
  %v153 = vpop.f32.mrb[0].mxu0
  %v154 = vadd.f32 %v50, %v153
  %v155 = vpop.f32.mrb[0].mxu0
  %v156 = vpop.f32.mrb[0].mxu0
  %v157 = vadd.f32 %v50, %v156
  %v158 = vpop.f32.mrb[0].mxu0
  %159 = vmatprep.mubr.bf16.mxu0 0
  %160 = vmatmul.mubr.bf16.gmra.mrb[0].mxu0 %v84
  %v161 = vpop.f32.mrb[0].mxu0
  %v162 = vadd.f32 %v50, %v161
  %v163 = vpop.f32.mrb[0].mxu0
  %v164 = vpop.f32.mrb[0].mxu0
  %v165 = vadd.f32 %v50, %v164
  %v166 = vpop.f32.mrb[0].mxu0
  %167 = vmatprep.mubr.bf16.mxu0 0
  %168 = vmatmul.mubr.bf16.gmra.mrb[0].mxu0 %v87
  %v169 = vpop.f32.mrb[0].mxu0
  %v170 = vadd.f32 %v50, %v169
  %v171 = vpop.f32.mrb[0].mxu0
  %v172 = vpop.f32.mrb[0].mxu0
  %v173 = vadd.f32 %v50, %v172
  %v174 = vpop.f32.mrb[0].mxu0
  %175 = vmatprep.mubr.bf16.mxu0 0
  %176 = vmatmul.mubr.bf16.gmra.mrb[0].mxu0 %v90
  %v177 = vpop.f32.mrb[0].mxu0
  %v178 = vadd.f32 %v50, %v177
  %v179 = vpop.f32.mrb[0].mxu0
  %v180 = vpop.f32.mrb[0].mxu0
  %v181 = vadd.f32 %v50, %v180
  %v182 = vpop.f32.mrb[0].mxu0
  %183 = vmatprep.mubr.bf16.mxu0 0
  %184 = vmatmul.mubr.bf16.gmra.mrb[0].mxu0 %v93
  %v185 = vpop.f32.mrb[0].mxu0
  %v186 = vadd.f32 %v50, %v185
  %v187 = vpop.f32.mrb[0].mxu0
  %v188 = vpop.f32.mrb[0].mxu0
  %v189 = vadd.f32 %v50, %v188
  %v190 = vpop.f32.mrb[0].mxu0
  %191 = vdwg.mxu0
  %vm192 = vcmask 261120
  %193 = vst.msk [vmem:[%s3] sm:$0xff] %vm192, %v130
  %194 = vst.msk [vmem:[%s3 + $0x8] sm:$0xff] %vm192, %v133
  %195 = vst.msk [vmem:[%s3 + $0x10] sm:$0xff] %vm192, %v138
  %196 = vst.msk [vmem:[%s3 + $0x18] sm:$0xff] %vm192, %v141
  %197 = vst.msk [vmem:[%s3 + $0x20] sm:$0xff] %vm192, %v146
  %198 = vst.msk [vmem:[%s3 + $0x28] sm:$0xff] %vm192, %v149
  %199 = vst.msk [vmem:[%s3 + $0x30] sm:$0xff] %vm192, %v154
  %200 = vst.msk [vmem:[%s3 + $0x38] sm:$0xff] %vm192, %v157
  %201 = vst.msk [vmem:[%s3 + $0x40] sm:$0xff] %vm192, %v162
  %202 = vst.msk [vmem:[%s3 + $0x48] sm:$0xff] %vm192, %v165
  %203 = vst.msk [vmem:[%s3 + $0x50] sm:$0xff] %vm192, %v170
  %204 = vst.msk [vmem:[%s3 + $0x58] sm:$0xff] %vm192, %v173
  %205 = vst.msk [vmem:[%s3 + $0x60] sm:$0xff] %vm192, %v178
  %206 = vst.msk [vmem:[%s3 + $0x68] sm:$0xff] %vm192, %v181
  %207 = vst.msk [vmem:[%s3 + $0x70] sm:$0xff] %vm192, %v186
  %208 = vst.msk [vmem:[%s3 + $0x78] sm:$0xff] %vm192, %v189
  // Predicated region
  $region14: #{tpu_custom_call.1} parent=0 // pred_check
    _
  $region15: #{tpu_custom_call.1} parent=0 // pred_check_branch
    %210 = sbr.rel (0) target = $region17
  $region16: #{tpu_custom_call.1} parent=0 // pred_region
    _
  $region17: #{tpu_custom_call.1} parent=0 // pred_fallthru
    _
  // Predicated region
  $region18: #{tpu_custom_call.1} parent=0 // pred_check
    _
  $region19: #{tpu_custom_call.1} parent=0 // pred_check_branch
    %212 = sbr.rel (0) target = $region21
  $region20: #{tpu_custom_call.1} parent=0 // pred_region
    _
  $region21: #{tpu_custom_call.1} parent=0 // pred_fallthru
    _

</llo_original>
